<compile_context>
chip_gen: v6e
topology: v6e:2x2x1
jax: 0.10.0
libtpu: 0.0.40
codegen_flags: <defaults>
</compile_context>

<pallas_src>
import jax
import jax.numpy as jnp
from jax.experimental import pallas as pl
from jax.experimental.pallas import tpu as pltpu


# ----------------------------- problem sizes ------------------------------
FEATURE_DIM = 32     # feature_dim
HIDDEN_DIM  = 32     # hidden_dim (small test size; module default is 256)
NUM_NOISE   = 20     # num_noise
BATCH       = 4
C_NOISE     = 0.5    # c_noise
# q_activ == 'relu'

D  = FEATURE_DIM
H  = HIDDEN_DIM
H2 = 2 * HIDDEN_DIM
N  = NUM_NOISE
BN = BATCH * N            # 80 expanded rows
W  = 128                  # lane width used everywhere (one full vreg width)
RP = 128                  # BN padded to 128 rows
ACT_ROWS = 128            # activation slab rows (== SEL contraction dim)

assert 4 * D <= W and H2 <= W and BATCH <= 8 and 8 + N <= ACT_ROWS and BN <= RP

# row offsets inside the packed parameter slab (width = 128 lanes)
ROW_SEL  = 0               # [RP, 128]  expansion selector (one-hots, static)
ROW_WA   = ROW_SEL + RP    # [128,128]  [w1|w4] on rows 0:D, c_noise*[w1|w4] on D:2D
ROW_AVG  = ROW_WA + W      # [8, 128]   mean-over-noise matrix (entries 1/N)
ROW_WB   = ROW_AVG + 8     # [128,128]  blockdiag(w2, w5) on rows/cols 0:2H
ROW_WC   = ROW_WB + W      # [128,128]  col0 = w3 (rows 0:H), col1 = w6 (rows H:2H)
ROW_BIAS = ROW_WC + W      # [8, 128]   row0=[b1|b4], row1=[b2|b5], row2=[b3,b6,0..]
ROWS     = ROW_BIAS + 8
assert all(r % 8 == 0 for r in (ROW_SEL, ROW_WA, ROW_AVG, ROW_WB, ROW_WC, ROW_BIAS, ROWS))


# ------------------------------- kernel -----------------------------------
def critic_kernel(act_ref, params_ref, q_ref):
    # Activation slab [128, 128]:
    #   rows 0:B   : cols 0:D = mean,  cols D:2D = log_std
    #   rows 8:8+N : cols 2D:3D = 1.0, cols 3D:4D = noise
    act = act_ref[...]

    # std = exp(log_std) only on the log_std sub-block (EUP + one select).
    row  = jax.lax.broadcasted_iota(jnp.int32, act.shape, 0)
    lane = jax.lax.broadcasted_iota(jnp.int32, act.shape, 1)
    is_logstd = (row < 8) & (lane >= D) & (lane < 2 * D)
    act = jnp.where(is_logstd, jnp.exp(act), act)

    # Expansion: one MXU push.  rep[bn] = [mean[b] | std[b] | 1 | noise[n]]
    sel = params_ref[ROW_SEL:ROW_SEL + RP, :]
    rep = jnp.dot(sel, act, preferred_element_type=jnp.float32)        # [128,128]

    # Pair lanes via a half-width rotate (XLU) and multiply (VPU):
    #   z[:, 0:D]   = mean_rep
    #   z[:, D:2D]  = std_rep * noise_rep        (c_noise folded into W_A2)
    #   z[:, 2D:4D] = garbage -> hits zero rows of W_A2
    z = rep * pltpu.roll(rep, shift=2 * D, axis=1)

    bias_blk = params_ref[ROW_BIAS:ROW_BIAS + 8, :]
    ba = bias_blk[0:1, :]
    bb = bias_blk[1:2, :]
    bc = bias_blk[2:3, :]

    # Layer A (both heads fused): [128,128] @ [128,128]
    wa = params_ref[ROW_WA:ROW_WA + W, :]
    h1 = jnp.maximum(jnp.dot(z, wa, preferred_element_type=jnp.float32) + ba, 0.0)

    # Mean over the N noise samples per batch row: precomputed [8,128] @ [128,128]
    avg = params_ref[ROW_AVG:ROW_AVG + 8, :]
    hm = jnp.dot(avg, h1, preferred_element_type=jnp.float32)          # [8, 128]

    # Layer B (block-diagonal keeps the heads independent)
    wb = params_ref[ROW_WB:ROW_WB + W, :]
    h2 = jnp.maximum(jnp.dot(hm, wb, preferred_element_type=jnp.float32) + bb, 0.0)

    # Layer C: col 0 = q1, col 1 = q2
    wc = params_ref[ROW_WC:ROW_WC + W, :]
    q = jnp.dot(h2, wc, preferred_element_type=jnp.float32) + bc
    q_ref[...] = q.astype(q_ref.dtype)                                 # lane-dense [8,128]


# --------------------------- parameter packing ------------------------------
def pack_params(p):
    """Pack the 6 linears + all static selector/averaging constants into one slab."""
    bn = jnp.arange(BN)

    sel = jnp.zeros((RP, W), jnp.float32)
    sel = sel.at[bn, bn // N].set(1.0)            # pick batch row  (mean | std)
    sel = sel.at[bn, 8 + bn % N].set(1.0)         # pick noise row  (1 | noise)

    wa_pair = jnp.concatenate([p["w1"], p["w4"]], axis=1)              # [D, 2H]
    wa2 = jnp.zeros((W, W), jnp.float32)
    wa2 = wa2.at[0:D, 0:H2].set(wa_pair)                               # mean lanes
    wa2 = wa2.at[D:2 * D, 0:H2].set(C_NOISE * wa_pair)                 # std*noise lanes

    avg = jnp.zeros((8, W), jnp.float32)
    avg = avg.at[bn // N, bn].set(1.0 / N)

    wb = jnp.zeros((W, W), jnp.float32)
    wb = wb.at[0:H, 0:H].set(p["w2"])
    wb = wb.at[H:H2, H:H2].set(p["w5"])

    wc = jnp.zeros((W, W), jnp.float32)
    wc = wc.at[0:H, 0].set(p["w3"][:, 0])
    wc = wc.at[H:H2, 1].set(p["w6"][:, 0])

    bias = jnp.zeros((8, W), jnp.float32)
    bias = bias.at[0, 0:H2].set(jnp.concatenate([p["b1"], p["b4"]], axis=1)[0])
    bias = bias.at[1, 0:H2].set(jnp.concatenate([p["b2"], p["b5"]], axis=1)[0])
    bias = bias.at[2, 0].set(p["b3"][0, 0])
    bias = bias.at[2, 1].set(p["b6"][0, 0])

    slab = jnp.concatenate([sel, wa2, avg, wb, wc, bias], axis=0)
    assert slab.shape == (ROWS, W)
    return slab


def pack_activations(mean, log_std, noise):
    """One [128, 128] per-call activation slab (single input DMA)."""
    b = mean.shape[0]
    act = jnp.zeros((ACT_ROWS, W), jnp.float32)
    act = act.at[0:b, 0:D].set(mean)
    act = act.at[0:b, D:2 * D].set(log_std)
    act = act.at[8:8 + N, 2 * D:3 * D].set(1.0)
    act = act.at[8:8 + N, 3 * D:4 * D].set(noise)
    return act


# ------------------------------- wrapper -----------------------------------
def critic_forward(mean, log_std, noise, params):
    """params: dict with w1..w6 ([in,out]) and b1..b6 ([1,out])."""
    b = mean.shape[0]
    slab = pack_params(params)          # static; would be cached across calls
    act = pack_activations(mean, log_std, noise)

    vmem = pl.BlockSpec(memory_space=pltpu.MemorySpace.VMEM)
    out = pl.pallas_call(
        critic_kernel,
        out_shape=jax.ShapeDtypeStruct((8, W), jnp.float32),
        in_specs=[vmem, vmem],
        out_specs=vmem,
    )(act, slab)
    return out[:b, 0:1], out[:b, 1:2]


# ------------------------ deterministic param init -------------------------
def init_linear(key, fan_in, fan_out):
    """Mimics torch.nn.Linear default init: U(-1/sqrt(fan_in), 1/sqrt(fan_in))."""
    kw, kb = jax.random.split(key)
    bound = 1.0 / jnp.sqrt(fan_in)
    w = jax.random.uniform(kw, (fan_in, fan_out), jnp.float32, -bound, bound)
    b = jax.random.uniform(kb, (1, fan_out), jnp.float32, -bound, bound)
    return w, b


def make_params(key):
    keys = jax.random.split(key, 6)
    w1, b1 = init_linear(keys[0], FEATURE_DIM, HIDDEN_DIM)
    w2, b2 = init_linear(keys[1], HIDDEN_DIM, HIDDEN_DIM)
    w3, b3 = init_linear(keys[2], HIDDEN_DIM, 1)
    w4, b4 = init_linear(keys[3], FEATURE_DIM, HIDDEN_DIM)
    w5, b5 = init_linear(keys[4], HIDDEN_DIM, HIDDEN_DIM)
    w6, b6 = init_linear(keys[5], HIDDEN_DIM, 1)
    return dict(w1=w1, b1=b1, w2=w2, b2=b2, w3=w3, b3=b3,
                w4=w4, b4=b4, w5=w5, b5=b5, w6=w6, b6=b6)


# --------------------------- pure-JAX reference -----------------------------
def critic_reference(mean, log_std, noise, p):
    std = jnp.exp(log_std)
    b, d = mean.shape
    x = mean[:, None, :] + std[:, None, :] * noise[None, :, :] * C_NOISE
    x = x.reshape(-1, d)

    def head(wa, ba, wb, bb, wc, bc):
        h = jax.nn.relu(x @ wa + ba)
        h = h.reshape(b, NUM_NOISE, -1).mean(axis=1)
        h = jax.nn.relu(h @ wb + bb)
        return h @ wc + bc

    q1 = head(p["w1"], p["b1"], p["w2"], p["b2"], p["w3"], p["b3"])
    q2 = head(p["w4"], p["b4"], p["w5"], p["b5"], p["w6"], p["b6"])
    return q1, q2


# ---------------------------------- main ------------------------------------
if __name__ == "__main__":
    key = jax.random.PRNGKey(0)
    k_mean, k_std, k_noise, k_params = jax.random.split(key, 4)

    mean = jax.random.normal(k_mean, (BATCH, FEATURE_DIM), jnp.float32)
    log_std = 0.1 * jax.random.normal(k_std, (BATCH, FEATURE_DIM), jnp.float32)
    noise = jax.random.normal(k_noise, (NUM_NOISE, FEATURE_DIM), jnp.float32)

    params = make_params(k_params)

    q1, q2 = critic_forward(mean, log_std, noise, params)
    q1 = jax.block_until_ready(q1)
    q2 = jax.block_until_ready(q2)

    r1, r2 = critic_reference(mean, log_std, noise, params)
    assert q1.shape == (BATCH, 1) and q2.shape == (BATCH, 1)
    assert jnp.allclose(q1, r1, atol=1e-4, rtol=1e-4)
    assert jnp.allclose(q2, r2, atol=1e-4, rtol=1e-4)

    print("KERNEL_OK")
</pallas_src>

<mosaic_0001>
module attributes {stable_mosaic.version = 11 : i64} {
  func.func @critic_kernel(%arg0: memref<128x128xf32, #tpu.memory_space<vmem>>, %arg1: memref<528x128xf32, #tpu.memory_space<vmem>>, %arg2: memref<8x128xf32, #tpu.memory_space<vmem>>) attributes {dimension_semantics = [], scalar_prefetch = 0 : i64, scratch_operands = 0 : i64, tpu.core_type = #tpu.core_type<tc>} {
    %c0 = arith.constant 0 : index
    %c0_0 = arith.constant 0 : index
    %0 = vector.load %arg0[%c0, %c0_0] : memref<128x128xf32, #tpu.memory_space<vmem>>, vector<128x128xf32>
    %1 = tpu.iota {dimensions = array<i32: 0>} : vector<128x128xi32>
    %2 = tpu.iota {dimensions = array<i32: 1>} : vector<128x128xi32>
    %c8_i32 = arith.constant 8 : i32
    %3 = vector.broadcast %c8_i32 : i32 to vector<128x128xi32>
    %4 = arith.cmpi slt, %1, %3 : vector<128x128xi32>
    %c32_i32 = arith.constant 32 : i32
    %5 = vector.broadcast %c32_i32 : i32 to vector<128x128xi32>
    %6 = arith.cmpi sge, %2, %5 : vector<128x128xi32>
    %7 = arith.andi %4, %6 : vector<128x128xi1>
    %c64_i32 = arith.constant 64 : i32
    %8 = vector.broadcast %c64_i32 : i32 to vector<128x128xi32>
    %9 = arith.cmpi slt, %2, %8 : vector<128x128xi32>
    %10 = arith.andi %7, %9 : vector<128x128xi1>
    %11 = math.exp %0 : vector<128x128xf32>
    %12 = arith.select %10, %11, %0 : vector<128x128xi1>, vector<128x128xf32>
    %c0_1 = arith.constant 0 : index
    %c0_2 = arith.constant 0 : index
    %13 = vector.load %arg1[%c0_1, %c0_2] : memref<528x128xf32, #tpu.memory_space<vmem>>, vector<128x128xf32>
    %cst = arith.constant dense<0.000000e+00> : vector<128x128xf32>
    %14 = tpu.matmul %13, %12, %cst {dimension_numbers = #tpu.dot_dimension_numbers<[1], [0], [0], [1], [0, 0, 1, 1], [], []>} : vector<128x128xf32>, vector<128x128xf32>, vector<128x128xf32> -> vector<128x128xf32>
    %c64_i32_3 = arith.constant 64 : i32
    %15 = tpu.dynamic_rotate %14 by %c64_i32_3 dim 1 : vector<128x128xf32>, i32 -> vector<128x128xf32>
    %16 = arith.mulf %14, %15 : vector<128x128xf32>
    %c520 = arith.constant 520 : index
    %c0_4 = arith.constant 0 : index
    %17 = vector.load %arg1[%c520, %c0_4] : memref<528x128xf32, #tpu.memory_space<vmem>>, vector<8x128xf32>
    %18 = vector.extract_strided_slice %17 {offsets = [0, 0], sizes = [1, 128], strides = [1, 1]} : vector<8x128xf32> to vector<1x128xf32>
    %19 = vector.extract_strided_slice %17 {offsets = [1, 0], sizes = [1, 128], strides = [1, 1]} : vector<8x128xf32> to vector<1x128xf32>
    %20 = vector.extract_strided_slice %17 {offsets = [2, 0], sizes = [1, 128], strides = [1, 1]} : vector<8x128xf32> to vector<1x128xf32>
    %c128 = arith.constant 128 : index
    %c0_5 = arith.constant 0 : index
    %21 = vector.load %arg1[%c128, %c0_5] : memref<528x128xf32, #tpu.memory_space<vmem>>, vector<128x128xf32>
    %cst_6 = arith.constant dense<0.000000e+00> : vector<128x128xf32>
    %22 = tpu.matmul %16, %21, %cst_6 {dimension_numbers = #tpu.dot_dimension_numbers<[1], [0], [0], [1], [0, 0, 1, 1], [], []>} : vector<128x128xf32>, vector<128x128xf32>, vector<128x128xf32> -> vector<128x128xf32>
    %23 = vector.broadcast %18 : vector<1x128xf32> to vector<128x128xf32>
    %24 = arith.addf %22, %23 : vector<128x128xf32>
    %cst_7 = arith.constant 0.000000e+00 : f32
    %25 = vector.broadcast %cst_7 : f32 to vector<128x128xf32>
    %26 = arith.maximumf %24, %25 : vector<128x128xf32>
    %c256 = arith.constant 256 : index
    %c0_8 = arith.constant 0 : index
    %27 = vector.load %arg1[%c256, %c0_8] : memref<528x128xf32, #tpu.memory_space<vmem>>, vector<8x128xf32>
    %cst_9 = arith.constant dense<0.000000e+00> : vector<8x128xf32>
    %28 = tpu.matmul %27, %26, %cst_9 {dimension_numbers = #tpu.dot_dimension_numbers<[1], [0], [0], [1], [0, 0, 1, 1], [], []>} : vector<8x128xf32>, vector<128x128xf32>, vector<8x128xf32> -> vector<8x128xf32>
    %c264 = arith.constant 264 : index
    %c0_10 = arith.constant 0 : index
    %29 = vector.load %arg1[%c264, %c0_10] : memref<528x128xf32, #tpu.memory_space<vmem>>, vector<128x128xf32>
    %cst_11 = arith.constant dense<0.000000e+00> : vector<8x128xf32>
    %30 = tpu.matmul %28, %29, %cst_11 {dimension_numbers = #tpu.dot_dimension_numbers<[1], [0], [0], [1], [0, 0, 1, 1], [], []>} : vector<8x128xf32>, vector<128x128xf32>, vector<8x128xf32> -> vector<8x128xf32>
    %31 = vector.broadcast %19 : vector<1x128xf32> to vector<8x128xf32>
    %32 = arith.addf %30, %31 : vector<8x128xf32>
    %cst_12 = arith.constant 0.000000e+00 : f32
    %33 = vector.broadcast %cst_12 : f32 to vector<8x128xf32>
    %34 = arith.maximumf %32, %33 : vector<8x128xf32>
    %c392 = arith.constant 392 : index
    %c0_13 = arith.constant 0 : index
    %35 = vector.load %arg1[%c392, %c0_13] : memref<528x128xf32, #tpu.memory_space<vmem>>, vector<128x128xf32>
    %cst_14 = arith.constant dense<0.000000e+00> : vector<8x128xf32>
    %36 = tpu.matmul %34, %35, %cst_14 {dimension_numbers = #tpu.dot_dimension_numbers<[1], [0], [0], [1], [0, 0, 1, 1], [], []>} : vector<8x128xf32>, vector<128x128xf32>, vector<8x128xf32> -> vector<8x128xf32>
    %37 = vector.broadcast %20 : vector<1x128xf32> to vector<8x128xf32>
    %38 = arith.addf %36, %37 : vector<8x128xf32>
    %c0_15 = arith.constant 0 : index
    %c0_16 = arith.constant 0 : index
    %39 = vector.load %arg2[%c0_15, %c0_16] : memref<8x128xf32, #tpu.memory_space<vmem>>, vector<8x128xf32>
    tpu.vector_store %arg2[%c0_15, %c0_16], %38 {strides = array<i32>} : memref<8x128xf32, #tpu.memory_space<vmem>>, vector<8x128xf32>,
    return
  }
}

</mosaic_0001>

<llo_original>
// kernel: tpu_custom_call.1
$region0: #{tpu_custom_call.1}
  #allocation0 [shape = 'u32[]', space=smem, size = 0x4, offset = 0x4, fixed_abs, tag = 'smem constant byte address 0x4 - core index']
  #allocation1 [shape = 'u32[144,128]{1,0:T(1,128)}', space=vmem, size = 0x12000, scoped, tag = 'internal scratch']
  %s0 = inlined_call_operand.hbm [shape: f32[128,128], index: 0, kind: input, shape index: {}]
  %s1 = inlined_call_operand.hbm [shape: f32[528,128], index: 1, kind: input, shape index: {}]
  %s2 = inlined_call_operand.hbm [shape: f32[8,128], index: 2, kind: output, shape index: {}]
  %s3 = sld [smem:[#allocation0]]
  $region26: #{tpu_custom_call.1} parent=0
    _
  %s5 = ssub.s32 1, %s3
  %s6 = scalar_select 0, %s5, %s3
  $region1: #{tpu_custom_call.1} parent=0
    #allocation2 [shape = 'u8[65536]{0}', space=vmem, size = 0x10000, scoped, tag = 'input window, operand 0, single buffered']
    #allocation3 [shape = 's32[1]{0}', space=sflag, size = 0x4, scoped, tag = 'scoped memory for tpu_custom_call.1']
    #allocation4 [shape = 's32[1]{0}', space=sflag, size = 0x4, scoped, tag = 'scoped memory for tpu_custom_call.1']
    #allocation5 [shape = 'u8[270336]{0}', space=vmem, size = 0x42000, scoped, tag = 'input window, operand 1, single buffered']
    #allocation6 [shape = 's32[1]{0}', space=sflag, size = 0x4, scoped, tag = 'scoped memory for tpu_custom_call.1']
    #allocation7 [shape = 'u8[4096]{0}', space=vmem, size = 0x1000, scoped, tag = 'output window, operand 0, single buffered']
    %7 = vsyncpa [#allocation3], 0
    %8 = vsyncpa [#allocation6], 0
    %9 = vsyncpa [#allocation4], 0
    // Predicated region
    $region2: #{tpu_custom_call.1} parent=1 // pred_check
      _
    $region3: #{tpu_custom_call.1} parent=1 // pred_check_branch
      %11 = sbr.rel (0) target = $region5
    $region4: #{tpu_custom_call.1} parent=1 // pred_region
      %s13 = ssub.s32 2048, 2048
      %14 = vsyncadd [#allocation3], %s13
      %s15 = sshll.u32 [#allocation2], 4
      %s16 = int_to_ptr.vmem [resolvable:$true] %s15
      %21 = dma.hbm_to_vmem [thread:$0]  %s0, 2048, %s16, [#allocation3], 128, 128, 8
    $region5: #{tpu_custom_call.1} parent=1 // pred_fallthru
      _
    // Predicated region
    $region6: #{tpu_custom_call.1} parent=1 // pred_check
      _
    $region7: #{tpu_custom_call.1} parent=1 // pred_check_branch
      %23 = sbr.rel (0) target = $region9
    $region8: #{tpu_custom_call.1} parent=1 // pred_region
      %s25 = ssub.s32 8448, 8448
      %26 = vsyncadd [#allocation6], %s25
      %s27 = sshll.u32 [#allocation5], 4
      %s28 = int_to_ptr.vmem [resolvable:$true] %s27
      %33 = dma.hbm_to_vmem [thread:$0]  %s1, 8448, %s28, [#allocation6], 128, 128, 8
    $region9: #{tpu_custom_call.1} parent=1 // pred_fallthru
      _
    // Predicated region
    $region10: #{tpu_custom_call.1} parent=1 // pred_check
      _
    $region11: #{tpu_custom_call.1} parent=1 // pred_check_branch
      %35 = sbr.rel (0) target = $region13
    $region12: #{tpu_custom_call.1} parent=1 // pred_region
      %36 = dma.done [#allocation3], 2048
    $region13: #{tpu_custom_call.1} parent=1 // pred_fallthru
      _
    // Predicated region
    $region14: #{tpu_custom_call.1} parent=1 // pred_check
      _
    $region15: #{tpu_custom_call.1} parent=1 // pred_check_branch
      %38 = sbr.rel (0) target = $region17
    $region16: #{tpu_custom_call.1} parent=1 // pred_region
      %39 = dma.done [#allocation6], 8448
    $region17: #{tpu_custom_call.1} parent=1 // pred_fallthru
      _
    %v40 = vld [vmem:[#allocation2] sm:$0xff]
    %v41 = vld [vmem:[#allocation2 + $0x8] sm:$0xff]
    %v42 = vld [vmem:[#allocation2 + $0x10] sm:$0xff]
    %v43 = vld [vmem:[#allocation2 + $0x18] sm:$0xff]
    %v44 = vld [vmem:[#allocation2 + $0x20] sm:$0xff]
    %v45 = vld [vmem:[#allocation2 + $0x28] sm:$0xff]
    %v46 = vld [vmem:[#allocation2 + $0x30] sm:$0xff]
    %v47 = vld [vmem:[#allocation2 + $0x38] sm:$0xff]
    %v48 = vld [vmem:[#allocation2 + $0x40] sm:$0xff]
    %v49 = vld [vmem:[#allocation2 + $0x48] sm:$0xff]
    %v50 = vld [vmem:[#allocation2 + $0x50] sm:$0xff]
    %v51 = vld [vmem:[#allocation2 + $0x58] sm:$0xff]
    %v52 = vld [vmem:[#allocation2 + $0x60] sm:$0xff]
    %v53 = vld [vmem:[#allocation2 + $0x68] sm:$0xff]
    %v54 = vld [vmem:[#allocation2 + $0x70] sm:$0xff]
    %v55 = vld [vmem:[#allocation2 + $0x78] sm:$0xff]
    %v56 = vlaneseq
    %v57 = vshrl.u32 %v56, 7
    %v58 = vadd.s32 %v57, 8
    %v59 = vadd.s32 %v57, 16
    %v60 = vadd.s32 %v57, 24
    %v61 = vadd.s32 %v57, 32
    %v62 = vadd.s32 %v57, 40
    %v63 = vadd.s32 %v57, 48
    %v64 = vadd.s32 %v57, 56
    %v65 = vadd.s32 %v57, 64
    %v66 = vadd.s32 %v57, 72
    %v67 = vadd.s32 %v57, 80
    %v68 = vadd.s32 %v57, 88
    %v69 = vadd.s32 %v57, 96
    %v70 = vadd.s32 %v57, 104
    %v71 = vadd.s32 %v57, 112
    %v72 = vadd.s32 %v57, 120
    %v73 = vlaneseq
    %v74 = vand.u32 %v73, 127
    %vm75 = vcmp.lt.s32.totalorder %v57, 8
    %vm76 = vcmp.lt.s32.totalorder %v58, 8
    %vm77 = vcmp.lt.s32.totalorder %v59, 8
    %vm78 = vcmp.lt.s32.totalorder %v60, 8
    %vm79 = vcmp.lt.s32.totalorder %v61, 8
    %vm80 = vcmp.lt.s32.totalorder %v62, 8
    %vm81 = vcmp.lt.s32.totalorder %v63, 8
    %vm82 = vcmp.lt.s32.totalorder %v64, 8
    %vm83 = vcmp.lt.s32.totalorder %v65, 8
    %vm84 = vcmp.lt.s32.totalorder %v66, 8
    %vm85 = vcmp.lt.s32.totalorder %v67, 8
    %vm86 = vcmp.lt.s32.totalorder %v68, 8
    %vm87 = vcmp.lt.s32.totalorder %v69, 8
    %vm88 = vcmp.lt.s32.totalorder %v70, 8
    %vm89 = vcmp.lt.s32.totalorder %v71, 8
    %vm90 = vcmp.lt.s32.totalorder %v72, 8
    %vm91 = vcmp.ge.s32.totalorder %v74, 32
    %vm92 = vmand %vm75, %vm91
    %vm93 = vmand %vm76, %vm91
    %vm94 = vmand %vm77, %vm91
    %vm95 = vmand %vm78, %vm91
    %vm96 = vmand %vm79, %vm91
    %vm97 = vmand %vm80, %vm91
    %vm98 = vmand %vm81, %vm91
    %vm99 = vmand %vm82, %vm91
    %vm100 = vmand %vm83, %vm91
    %vm101 = vmand %vm84, %vm91
    %vm102 = vmand %vm85, %vm91
    %vm103 = vmand %vm86, %vm91
    %vm104 = vmand %vm87, %vm91
    %vm105 = vmand %vm88, %vm91
    %vm106 = vmand %vm89, %vm91
    %vm107 = vmand %vm90, %vm91
    %vm108 = vcmp.lt.s32.totalorder %v74, 64
    %vm109 = vmand %vm92, %vm108
    %vm110 = vmand %vm93, %vm108
    %vm111 = vmand %vm94, %vm108
    %vm112 = vmand %vm95, %vm108
    %vm113 = vmand %vm96, %vm108
    %vm114 = vmand %vm97, %vm108
    %vm115 = vmand %vm98, %vm108
    %vm116 = vmand %vm99, %vm108
    %vm117 = vmand %vm100, %vm108
    %vm118 = vmand %vm101, %vm108
    %vm119 = vmand %vm102, %vm108
    %vm120 = vmand %vm103, %vm108
    %vm121 = vmand %vm104, %vm108
    %vm122 = vmand %vm105, %vm108
    %vm123 = vmand %vm106, %vm108
    %vm124 = vmand %vm107, %vm108
    %v125 = vmul.f32 %v40, 1.442695
    %v126 = vpow.pop %v125
    %v127 = vmul.f32 %v41, 1.442695
    %v128 = vpow.pop %v127
    %v129 = vmul.f32 %v42, 1.442695
    %v130 = vpow.pop %v129
    %v131 = vmul.f32 %v43, 1.442695
    %v132 = vpow.pop %v131
    %v133 = vmul.f32 %v44, 1.442695
    %v134 = vpow.pop %v133
    %v135 = vmul.f32 %v45, 1.442695
    %v136 = vpow.pop %v135
    %v137 = vmul.f32 %v46, 1.442695
    %v138 = vpow.pop %v137
    %v139 = vmul.f32 %v47, 1.442695
    %v140 = vpow.pop %v139
    %v141 = vmul.f32 %v48, 1.442695
    %v142 = vpow.pop %v141
    %v143 = vmul.f32 %v49, 1.442695
    %v144 = vpow.pop %v143
    %v145 = vmul.f32 %v50, 1.442695
    %v146 = vpow.pop %v145
    %v147 = vmul.f32 %v51, 1.442695
    %v148 = vpow.pop %v147
    %v149 = vmul.f32 %v52, 1.442695
    %v150 = vpow.pop %v149
    %v151 = vmul.f32 %v53, 1.442695
    %v152 = vpow.pop %v151
    %v153 = vmul.f32 %v54, 1.442695
    %v154 = vpow.pop %v153
    %v155 = vmul.f32 %v55, 1.442695
    %v156 = vpow.pop %v155
    %v157 = vsel %vm109, %v126, %v40
    %v158 = vsel %vm110, %v128, %v41
    %v159 = vsel %vm111, %v130, %v42
    %v160 = vsel %vm112, %v132, %v43
    %v161 = vsel %vm113, %v134, %v44
    %v162 = vsel %vm114, %v136, %v45
    %v163 = vsel %vm115, %v138, %v46
    %v164 = vsel %vm116, %v140, %v47
    %v165 = vsel %vm117, %v142, %v48
    %v166 = vsel %vm118, %v144, %v49
    %v167 = vsel %vm119, %v146, %v50
    %v168 = vsel %vm120, %v148, %v51
    %v169 = vsel %vm121, %v150, %v52
    %v170 = vsel %vm122, %v152, %v53
    %v171 = vsel %vm123, %v154, %v54
    %v172 = vsel %vm124, %v156, %v55
    %v173 = vld [vmem:[#allocation5] sm:$0xff]
    %v174 = vld [vmem:[#allocation5 + $0x8] sm:$0xff]
    %v175 = vld [vmem:[#allocation5 + $0x10] sm:$0xff]
    %v176 = vld [vmem:[#allocation5 + $0x18] sm:$0xff]
    %v177 = vld [vmem:[#allocation5 + $0x20] sm:$0xff]
    %v178 = vld [vmem:[#allocation5 + $0x28] sm:$0xff]
    %v179 = vld [vmem:[#allocation5 + $0x30] sm:$0xff]
    %v180 = vld [vmem:[#allocation5 + $0x38] sm:$0xff]
    %v181 = vld [vmem:[#allocation5 + $0x40] sm:$0xff]
    %v182 = vld [vmem:[#allocation5 + $0x48] sm:$0xff]
    %v183 = vld [vmem:[#allocation5 + $0x50] sm:$0xff]
    %v184 = vld [vmem:[#allocation5 + $0x58] sm:$0xff]
    %v185 = vld [vmem:[#allocation5 + $0x60] sm:$0xff]
    %v186 = vld [vmem:[#allocation5 + $0x68] sm:$0xff]
    %v187 = vld [vmem:[#allocation5 + $0x70] sm:$0xff]
    %v188 = vld [vmem:[#allocation5 + $0x78] sm:$0xff]
    %189 = vmatprep.subr.mxu0 0.0
    %190 = vmatpush1.msra.mxu0 %v172
    %191 = vmatprep.subr.mxu0 0.0
    %192 = vmatpush1.msra.mxu0 %v171
    %193 = vmatprep.subr.mxu0 0.0
    %194 = vmatpush1.msra.mxu0 %v170
    %195 = vmatprep.subr.mxu0 0.0
    %196 = vmatpush1.msra.mxu0 %v169
    %197 = vmatprep.subr.mxu0 0.0
    %198 = vmatpush1.msra.mxu0 %v168
    %199 = vmatprep.subr.mxu0 0.0
    %200 = vmatpush1.msra.mxu0 %v167
    %201 = vmatprep.subr.mxu0 0.0
    %202 = vmatpush1.msra.mxu0 %v166
    %203 = vmatprep.subr.mxu0 0.0
    %204 = vmatpush1.msra.mxu0 %v165
    %205 = vmatprep.subr.mxu0 0.0
    %206 = vmatpush1.msra.mxu0 %v164
    %207 = vmatprep.subr.mxu0 0.0
    %208 = vmatpush1.msra.mxu0 %v163
    %209 = vmatprep.subr.mxu0 0.0
    %210 = vmatpush1.msra.mxu0 %v162
    %211 = vmatprep.subr.mxu0 0.0
    %212 = vmatpush1.msra.mxu0 %v161
    %213 = vmatprep.subr.mxu0 0.0
    %214 = vmatpush1.msra.mxu0 %v160
    %215 = vmatprep.subr.mxu0 0.0
    %216 = vmatpush1.msra.mxu0 %v159
    %217 = vmatprep.subr.mxu0 0.0
    %218 = vmatpush1.msra.mxu0 %v158
    %219 = vmatprep.subr.mxu0 0.0
    %220 = vmatpush1.msra.mxu0 %v157
    %221 = vmatprep.subr.mxu0 0.0
    %222 = vmatpush2.msra.mxu0 0.0
    %223 = vmatprep.subr.mxu0 0.0
    %224 = vmatpush2.msra.mxu0 0.0
    %225 = vmatprep.subr.mxu0 0.0
    %226 = vmatpush2.msra.mxu0 0.0
    %227 = vmatprep.subr.mxu0 0.0
    %228 = vmatpush2.msra.mxu0 0.0
    %229 = vmatprep.subr.mxu0 0.0
    %230 = vmatpush2.msra.mxu0 0.0
    %231 = vmatprep.subr.mxu0 0.0
    %232 = vmatpush2.msra.mxu0 0.0
    %233 = vmatprep.subr.mxu0 0.0
    %234 = vmatpush2.msra.mxu0 0.0
    %235 = vmatprep.subr.mxu0 0.0
    %236 = vmatpush2.msra.mxu0 0.0
    %237 = vmatprep.subr.mxu0 0.0
    %238 = vmatpush2.msra.mxu0 0.0
    %239 = vmatprep.subr.mxu0 0.0
    %240 = vmatpush2.msra.mxu0 0.0
    %241 = vmatprep.subr.mxu0 0.0
    %242 = vmatpush2.msra.mxu0 0.0
    %243 = vmatprep.subr.mxu0 0.0
    %244 = vmatpush2.msra.mxu0 0.0
    %245 = vmatprep.subr.mxu0 0.0
    %246 = vmatpush2.msra.mxu0 0.0
    %247 = vmatprep.subr.mxu0 0.0
    %248 = vmatpush2.msra.mxu0 0.0
    %249 = vmatprep.subr.mxu0 0.0
    %250 = vmatpush2.msra.mxu0 0.0
    %251 = vmatprep.subr.mxu0 0.0
    %252 = vmatpush2.msra.mxu0 0.0
    %253 = vmatprep.mubr.f32.mxu0 0.0
    %254 = vmatmul.mubr.f32.gmra.mxu0 %v173
    %v255 = vpop.f32.mrf.mxu0
    %v256 = vadd.f32 0.0, %v255
    %v257 = vpop.f32.mrf.mxu0
    %258 = vmatprep.mubr.f32.mxu0 0.0
    %259 = vmatmul.mubr.f32.gmra.mxu0 %v174
    %v260 = vpop.f32.mrf.mxu0
    %v261 = vadd.f32 0.0, %v260
    %v262 = vpop.f32.mrf.mxu0
    %263 = vmatprep.mubr.f32.mxu0 0.0
    %264 = vmatmul.mubr.f32.gmra.mxu0 %v175
    %v265 = vpop.f32.mrf.mxu0
    %v266 = vadd.f32 0.0, %v265
    %v267 = vpop.f32.mrf.mxu0
    %268 = vmatprep.mubr.f32.mxu0 0.0
    %269 = vmatmul.mubr.f32.gmra.mxu0 %v176
    %v270 = vpop.f32.mrf.mxu0
    %v271 = vadd.f32 0.0, %v270
    %v272 = vpop.f32.mrf.mxu0
    %273 = vmatprep.mubr.f32.mxu0 0.0
    %274 = vmatmul.mubr.f32.gmra.mxu0 %v177
    %v275 = vpop.f32.mrf.mxu0
    %v276 = vadd.f32 0.0, %v275
    %v277 = vpop.f32.mrf.mxu0
    %278 = vmatprep.mubr.f32.mxu0 0.0
    %279 = vmatmul.mubr.f32.gmra.mxu0 %v178
    %v280 = vpop.f32.mrf.mxu0
    %v281 = vadd.f32 0.0, %v280
    %v282 = vpop.f32.mrf.mxu0
    %283 = vmatprep.mubr.f32.mxu0 0.0
    %284 = vmatmul.mubr.f32.gmra.mxu0 %v179
    %v285 = vpop.f32.mrf.mxu0
    %v286 = vadd.f32 0.0, %v285
    %v287 = vpop.f32.mrf.mxu0
    %288 = vmatprep.mubr.f32.mxu0 0.0
    %289 = vmatmul.mubr.f32.gmra.mxu0 %v180
    %v290 = vpop.f32.mrf.mxu0
    %v291 = vadd.f32 0.0, %v290
    %v292 = vpop.f32.mrf.mxu0
    %293 = vmatprep.mubr.f32.mxu0 0.0
    %294 = vmatmul.mubr.f32.gmra.mxu0 %v181
    %v295 = vpop.f32.mrf.mxu0
    %v296 = vadd.f32 0.0, %v295
    %v297 = vpop.f32.mrf.mxu0
    %298 = vmatprep.mubr.f32.mxu0 0.0
    %299 = vmatmul.mubr.f32.gmra.mxu0 %v182
    %v300 = vpop.f32.mrf.mxu0
    %v301 = vadd.f32 0.0, %v300
    %v302 = vpop.f32.mrf.mxu0
    %303 = vmatprep.mubr.f32.mxu0 0.0
    %304 = vmatmul.mubr.f32.gmra.mxu0 %v183
    %v305 = vpop.f32.mrf.mxu0
    %v306 = vadd.f32 0.0, %v305
    %v307 = vpop.f32.mrf.mxu0
    %308 = vmatprep.mubr.f32.mxu0 0.0
    %309 = vmatmul.mubr.f32.gmra.mxu0 %v184
    %v310 = vpop.f32.mrf.mxu0
    %v311 = vadd.f32 0.0, %v310
    %v312 = vpop.f32.mrf.mxu0
    %313 = vmatprep.mubr.f32.mxu0 0.0
    %314 = vmatmul.mubr.f32.gmra.mxu0 %v185
    %v315 = vpop.f32.mrf.mxu0
    %v316 = vadd.f32 0.0, %v315
    %v317 = vpop.f32.mrf.mxu0
    %318 = vmatprep.mubr.f32.mxu0 0.0
    %319 = vmatmul.mubr.f32.gmra.mxu0 %v186
    %v320 = vpop.f32.mrf.mxu0
    %v321 = vadd.f32 0.0, %v320
    %v322 = vpop.f32.mrf.mxu0
    %323 = vmatprep.mubr.f32.mxu0 0.0
    %324 = vmatmul.mubr.f32.gmra.mxu0 %v187
    %v325 = vpop.f32.mrf.mxu0
    %v326 = vadd.f32 0.0, %v325
    %v327 = vpop.f32.mrf.mxu0
    %328 = vmatprep.mubr.f32.mxu0 0.0
    %329 = vmatmul.mubr.f32.gmra.mxu0 %v188
    %v330 = vpop.f32.mrf.mxu0
    %v331 = vadd.f32 0.0, %v330
    %v332 = vpop.f32.mrf.mxu0
    %333 = vdwg.mxu0
    %334 = vrot.lane.b32.xlu0 %v256, 64
    %v335 = vpop.permute.xlu0 %334
    %336 = vrot.lane.b32.xlu0 %v261, 64
    %v337 = vpop.permute.xlu0 %336
    %338 = vrot.lane.b32.xlu0 %v266, 64
    %v339 = vpop.permute.xlu0 %338
    %340 = vrot.lane.b32.xlu0 %v271, 64
    %v341 = vpop.permute.xlu0 %340
    %342 = vrot.lane.b32.xlu0 %v276, 64
    %v343 = vpop.permute.xlu0 %342
    %344 = vrot.lane.b32.xlu0 %v281, 64
    %v345 = vpop.permute.xlu0 %344
    %346 = vrot.lane.b32.xlu0 %v286, 64
    %v347 = vpop.permute.xlu0 %346
    %348 = vrot.lane.b32.xlu0 %v291, 64
    %v349 = vpop.permute.xlu0 %348
    %350 = vrot.lane.b32.xlu0 %v296, 64
    %v351 = vpop.permute.xlu0 %350
    %352 = vrot.lane.b32.xlu0 %v301, 64
    %v353 = vpop.permute.xlu0 %352
    %354 = vrot.lane.b32.xlu0 %v306, 64
    %v355 = vpop.permute.xlu0 %354
    %356 = vrot.lane.b32.xlu0 %v311, 64
    %v357 = vpop.permute.xlu0 %356
    %358 = vrot.lane.b32.xlu0 %v316, 64
    %v359 = vpop.permute.xlu0 %358
    %360 = vrot.lane.b32.xlu0 %v321, 64
    %v361 = vpop.permute.xlu0 %360
    %362 = vrot.lane.b32.xlu0 %v326, 64
    %v363 = vpop.permute.xlu0 %362
    %364 = vrot.lane.b32.xlu0 %v331, 64
    %v365 = vpop.permute.xlu0 %364
    %v366 = vmul.f32 %v256, %v335
    %v367 = vmul.f32 %v261, %v337
    %v368 = vmul.f32 %v266, %v339
    %v369 = vmul.f32 %v271, %v341
    %v370 = vmul.f32 %v276, %v343
    %v371 = vmul.f32 %v281, %v345
    %v372 = vmul.f32 %v286, %v347
    %v373 = vmul.f32 %v291, %v349
    %v374 = vmul.f32 %v296, %v351
    %v375 = vmul.f32 %v301, %v353
    %v376 = vmul.f32 %v306, %v355
    %v377 = vmul.f32 %v311, %v357
    %v378 = vmul.f32 %v316, %v359
    %v379 = vmul.f32 %v321, %v361
    %v380 = vmul.f32 %v326, %v363
    %v381 = vmul.f32 %v331, %v365
    %v382 = vld [vmem:[#allocation5 + $0x208] sm:$0xff]
    %v383 = vld [vmem:[#allocation5 + $0x80] sm:$0xff]
    %v384 = vld [vmem:[#allocation5 + $0x88] sm:$0xff]
    %v385 = vld [vmem:[#allocation5 + $0x90] sm:$0xff]
    %v386 = vld [vmem:[#allocation5 + $0x98] sm:$0xff]
    %v387 = vld [vmem:[#allocation5 + $0xa0] sm:$0xff]
    %v388 = vld [vmem:[#allocation5 + $0xa8] sm:$0xff]
    %v389 = vld [vmem:[#allocation5 + $0xb0] sm:$0xff]
    %v390 = vld [vmem:[#allocation5 + $0xb8] sm:$0xff]
    %v391 = vld [vmem:[#allocation5 + $0xc0] sm:$0xff]
    %v392 = vld [vmem:[#allocation5 + $0xc8] sm:$0xff]
    %v393 = vld [vmem:[#allocation5 + $0xd0] sm:$0xff]
    %v394 = vld [vmem:[#allocation5 + $0xd8] sm:$0xff]
    %v395 = vld [vmem:[#allocation5 + $0xe0] sm:$0xff]
    %v396 = vld [vmem:[#allocation5 + $0xe8] sm:$0xff]
    %v397 = vld [vmem:[#allocation5 + $0xf0] sm:$0xff]
    %v398 = vld [vmem:[#allocation5 + $0xf8] sm:$0xff]
    %v399 = vlaneseq
    %v400 = vshrl.u32 %v399, 7
    %v401 = vsub.s32 0, %v400
    %v402 = vrot.slane %v382, %v401
    %403 = vmatprep.subr.mxu0 0.0
    %404 = vmatpush1.msra.mxu0 %v398
    %405 = vmatprep.subr.mxu0 0.0
    %406 = vmatpush1.msra.mxu0 %v397
    %407 = vmatprep.subr.mxu0 0.0
    %408 = vmatpush1.msra.mxu0 %v396
    %409 = vmatprep.subr.mxu0 0.0
    %410 = vmatpush1.msra.mxu0 %v395
    %411 = vmatprep.subr.mxu0 0.0
    %412 = vmatpush1.msra.mxu0 %v394
    %413 = vmatprep.subr.mxu0 0.0
    %414 = vmatpush1.msra.mxu0 %v393
    %415 = vmatprep.subr.mxu0 0.0
    %416 = vmatpush1.msra.mxu0 %v392
    %417 = vmatprep.subr.mxu0 0.0
    %418 = vmatpush1.msra.mxu0 %v391
    %419 = vmatprep.subr.mxu0 0.0
    %420 = vmatpush1.msra.mxu0 %v390
    %421 = vmatprep.subr.mxu0 0.0
    %422 = vmatpush1.msra.mxu0 %v389
    %423 = vmatprep.subr.mxu0 0.0
    %424 = vmatpush1.msra.mxu0 %v388
    %425 = vmatprep.subr.mxu0 0.0
    %426 = vmatpush1.msra.mxu0 %v387
    %427 = vmatprep.subr.mxu0 0.0
    %428 = vmatpush1.msra.mxu0 %v386
    %429 = vmatprep.subr.mxu0 0.0
    %430 = vmatpush1.msra.mxu0 %v385
    %431 = vmatprep.subr.mxu0 0.0
    %432 = vmatpush1.msra.mxu0 %v384
    %433 = vmatprep.subr.mxu0 0.0
    %434 = vmatpush1.msra.mxu0 %v383
    %435 = vmatprep.subr.mxu0 0.0
    %436 = vmatpush2.msra.mxu0 0.0
    %437 = vmatprep.subr.mxu0 0.0
    %438 = vmatpush2.msra.mxu0 0.0
    %439 = vmatprep.subr.mxu0 0.0
    %440 = vmatpush2.msra.mxu0 0.0
    %441 = vmatprep.subr.mxu0 0.0
    %442 = vmatpush2.msra.mxu0 0.0
    %443 = vmatprep.subr.mxu0 0.0
    %444 = vmatpush2.msra.mxu0 0.0
    %445 = vmatprep.subr.mxu0 0.0
    %446 = vmatpush2.msra.mxu0 0.0
    %447 = vmatprep.subr.mxu0 0.0
    %448 = vmatpush2.msra.mxu0 0.0
    %449 = vmatprep.subr.mxu0 0.0
    %450 = vmatpush2.msra.mxu0 0.0
    %451 = vmatprep.subr.mxu0 0.0
    %452 = vmatpush2.msra.mxu0 0.0
    %453 = vmatprep.subr.mxu0 0.0
    %454 = vmatpush2.msra.mxu0 0.0
    %455 = vmatprep.subr.mxu0 0.0
    %456 = vmatpush2.msra.mxu0 0.0
    %457 = vmatprep.subr.mxu0 0.0
    %458 = vmatpush2.msra.mxu0 0.0
    %459 = vmatprep.subr.mxu0 0.0
    %460 = vmatpush2.msra.mxu0 0.0
    %461 = vmatprep.subr.mxu0 0.0
    %462 = vmatpush2.msra.mxu0 0.0
    %463 = vmatprep.subr.mxu0 0.0
    %464 = vmatpush2.msra.mxu0 0.0
    %465 = vmatprep.subr.mxu0 0.0
    %466 = vmatpush2.msra.mxu0 0.0
    %467 = vmatprep.mubr.f32.mxu0 0.0
    %468 = vmatmul.mubr.f32.gmra.mxu0 %v366
    %v469 = vpop.f32.mrf.mxu0
    %v470 = vadd.f32 %v402, %v469
    %v471 = vpop.f32.mrf.mxu0
    %472 = vmatprep.mubr.f32.mxu0 0.0
    %473 = vmatmul.mubr.f32.gmra.mxu0 %v367
    %v474 = vpop.f32.mrf.mxu0
    %v475 = vadd.f32 %v402, %v474
    %v476 = vpop.f32.mrf.mxu0
    %477 = vmatprep.mubr.f32.mxu0 0.0
    %478 = vmatmul.mubr.f32.gmra.mxu0 %v368
    %v479 = vpop.f32.mrf.mxu0
    %v480 = vadd.f32 %v402, %v479
    %v481 = vpop.f32.mrf.mxu0
    %482 = vmatprep.mubr.f32.mxu0 0.0
    %483 = vmatmul.mubr.f32.gmra.mxu0 %v369
    %v484 = vpop.f32.mrf.mxu0
    %v485 = vadd.f32 %v402, %v484
    %v486 = vpop.f32.mrf.mxu0
    %487 = vmatprep.mubr.f32.mxu0 0.0
    %488 = vmatmul.mubr.f32.gmra.mxu0 %v370
    %v489 = vpop.f32.mrf.mxu0
    %v490 = vadd.f32 %v402, %v489
    %v491 = vpop.f32.mrf.mxu0
    %492 = vmatprep.mubr.f32.mxu0 0.0
    %493 = vmatmul.mubr.f32.gmra.mxu0 %v371
    %v494 = vpop.f32.mrf.mxu0
    %v495 = vadd.f32 %v402, %v494
    %v496 = vpop.f32.mrf.mxu0
    %497 = vmatprep.mubr.f32.mxu0 0.0
    %498 = vmatmul.mubr.f32.gmra.mxu0 %v372
    %v499 = vpop.f32.mrf.mxu0
    %v500 = vadd.f32 %v402, %v499
    %v501 = vpop.f32.mrf.mxu0
    %502 = vmatprep.mubr.f32.mxu0 0.0
    %503 = vmatmul.mubr.f32.gmra.mxu0 %v373
    %v504 = vpop.f32.mrf.mxu0
    %v505 = vadd.f32 %v402, %v504
    %v506 = vpop.f32.mrf.mxu0
    %507 = vmatprep.mubr.f32.mxu0 0.0
    %508 = vmatmul.mubr.f32.gmra.mxu0 %v374
    %v509 = vpop.f32.mrf.mxu0
    %v510 = vadd.f32 %v402, %v509
    %v511 = vpop.f32.mrf.mxu0
    %512 = vmatprep.mubr.f32.mxu0 0.0
    %513 = vmatmul.mubr.f32.gmra.mxu0 %v375
    %v514 = vpop.f32.mrf.mxu0
    %v515 = vadd.f32 %v402, %v514
    %v516 = vpop.f32.mrf.mxu0
    %517 = vmatprep.mubr.f32.mxu0 0.0
    %518 = vmatmul.mubr.f32.gmra.mxu0 %v376
    %v519 = vpop.f32.mrf.mxu0
    %v520 = vadd.f32 %v402, %v519
    %v521 = vpop.f32.mrf.mxu0
    %522 = vmatprep.mubr.f32.mxu0 0.0
    %523 = vmatmul.mubr.f32.gmra.mxu0 %v377
    %v524 = vpop.f32.mrf.mxu0
    %v525 = vadd.f32 %v402, %v524
    %v526 = vpop.f32.mrf.mxu0
    %527 = vmatprep.mubr.f32.mxu0 0.0
    %528 = vmatmul.mubr.f32.gmra.mxu0 %v378
    %v529 = vpop.f32.mrf.mxu0
    %v530 = vadd.f32 %v402, %v529
    %v531 = vpop.f32.mrf.mxu0
    %532 = vmatprep.mubr.f32.mxu0 0.0
    %533 = vmatmul.mubr.f32.gmra.mxu0 %v379
    %v534 = vpop.f32.mrf.mxu0
    %v535 = vadd.f32 %v402, %v534
    %v536 = vpop.f32.mrf.mxu0
    %537 = vmatprep.mubr.f32.mxu0 0.0
    %538 = vmatmul.mubr.f32.gmra.mxu0 %v380
    %v539 = vpop.f32.mrf.mxu0
    %v540 = vadd.f32 %v402, %v539
    %v541 = vpop.f32.mrf.mxu0
    %542 = vmatprep.mubr.f32.mxu0 0.0
    %543 = vmatmul.mubr.f32.gmra.mxu0 %v381
    %v544 = vpop.f32.mrf.mxu0
    %v545 = vadd.f32 %v402, %v544
    %v546 = vpop.f32.mrf.mxu0
    %547 = vdwg.mxu0
    %v548 = vmax.f32 %v470, 0.0
    %v549 = vmax.f32 %v475, 0.0
    %v550 = vmax.f32 %v480, 0.0
    %v551 = vmax.f32 %v485, 0.0
    %v552 = vmax.f32 %v490, 0.0
    %v553 = vmax.f32 %v495, 0.0
    %v554 = vmax.f32 %v500, 0.0
    %v555 = vmax.f32 %v505, 0.0
    %v556 = vmax.f32 %v510, 0.0
    %v557 = vmax.f32 %v515, 0.0
    %v558 = vmax.f32 %v520, 0.0
    %v559 = vmax.f32 %v525, 0.0
    %v560 = vmax.f32 %v530, 0.0
    %v561 = vmax.f32 %v535, 0.0
    %v562 = vmax.f32 %v540, 0.0
    %v563 = vmax.f32 %v545, 0.0
    %v564 = vld [vmem:[#allocation5 + $0x100] sm:$0xff]
    %565 = vmatprep.subr.mxu0 0.0
    %566 = vmatpush1.msra.mxu0 %v563
    %567 = vmatprep.subr.mxu0 0.0
    %568 = vmatpush1.msra.mxu0 %v562
    %569 = vmatprep.subr.mxu0 0.0
    %570 = vmatpush1.msra.mxu0 %v561
    %571 = vmatprep.subr.mxu0 0.0
    %572 = vmatpush1.msra.mxu0 %v560
    %573 = vmatprep.subr.mxu0 0.0
    %574 = vmatpush1.msra.mxu0 %v559
    %575 = vmatprep.subr.mxu0 0.0
    %576 = vmatpush1.msra.mxu0 %v558
    %577 = vmatprep.subr.mxu0 0.0
    %578 = vmatpush1.msra.mxu0 %v557
    %579 = vmatprep.subr.mxu0 0.0
    %580 = vmatpush1.msra.mxu0 %v556
    %581 = vmatprep.subr.mxu0 0.0
    %582 = vmatpush1.msra.mxu0 %v555
    %583 = vmatprep.subr.mxu0 0.0
    %584 = vmatpush1.msra.mxu0 %v554
    %585 = vmatprep.subr.mxu0 0.0
    %586 = vmatpush1.msra.mxu0 %v553
    %587 = vmatprep.subr.mxu0 0.0
    %588 = vmatpush1.msra.mxu0 %v552
    %589 = vmatprep.subr.mxu0 0.0
    %590 = vmatpush1.msra.mxu0 %v551
    %591 = vmatprep.subr.mxu0 0.0
    %592 = vmatpush1.msra.mxu0 %v550
    %593 = vmatprep.subr.mxu0 0.0
    %594 = vmatpush1.msra.mxu0 %v549
    %595 = vmatprep.subr.mxu0 0.0
    %596 = vmatpush1.msra.mxu0 %v548
    %597 = vmatprep.subr.mxu0 0.0
    %598 = vmatpush2.msra.mxu0 0.0
    %599 = vmatprep.subr.mxu0 0.0
    %600 = vmatpush2.msra.mxu0 0.0
    %601 = vmatprep.subr.mxu0 0.0
    %602 = vmatpush2.msra.mxu0 0.0
    %603 = vmatprep.subr.mxu0 0.0
    %604 = vmatpush2.msra.mxu0 0.0
    %605 = vmatprep.subr.mxu0 0.0
    %606 = vmatpush2.msra.mxu0 0.0
    %607 = vmatprep.subr.mxu0 0.0
    %608 = vmatpush2.msra.mxu0 0.0
    %609 = vmatprep.subr.mxu0 0.0
    %610 = vmatpush2.msra.mxu0 0.0
    %611 = vmatprep.subr.mxu0 0.0
    %612 = vmatpush2.msra.mxu0 0.0
    %613 = vmatprep.subr.mxu0 0.0
    %614 = vmatpush2.msra.mxu0 0.0
    %615 = vmatprep.subr.mxu0 0.0
    %616 = vmatpush2.msra.mxu0 0.0
    %617 = vmatprep.subr.mxu0 0.0
    %618 = vmatpush2.msra.mxu0 0.0
    %619 = vmatprep.subr.mxu0 0.0
    %620 = vmatpush2.msra.mxu0 0.0
    %621 = vmatprep.subr.mxu0 0.0
    %622 = vmatpush2.msra.mxu0 0.0
    %623 = vmatprep.subr.mxu0 0.0
    %624 = vmatpush2.msra.mxu0 0.0
    %625 = vmatprep.subr.mxu0 0.0
    %626 = vmatpush2.msra.mxu0 0.0
    %627 = vmatprep.subr.mxu0 0.0
    %628 = vmatpush2.msra.mxu0 0.0
    %629 = vmatprep.mubr.f32.mxu0 0.0
    %630 = vmatmul.mubr.f32.gmra.mxu0 %v564
    %v631 = vpop.f32.mrf.mxu0
    %v632 = vadd.f32 0.0, %v631
    %v633 = vpop.f32.mrf.mxu0
    %634 = vdwg.mxu0
    %v635 = vld [vmem:[#allocation5 + $0x108] sm:$0xff]
    %v636 = vld [vmem:[#allocation5 + $0x110] sm:$0xff]
    %v637 = vld [vmem:[#allocation5 + $0x118] sm:$0xff]
    %v638 = vld [vmem:[#allocation5 + $0x120] sm:$0xff]
    %v639 = vld [vmem:[#allocation5 + $0x128] sm:$0xff]
    %v640 = vld [vmem:[#allocation5 + $0x130] sm:$0xff]
    %v641 = vld [vmem:[#allocation5 + $0x138] sm:$0xff]
    %v642 = vld [vmem:[#allocation5 + $0x140] sm:$0xff]
    %v643 = vld [vmem:[#allocation5 + $0x148] sm:$0xff]
    %v644 = vld [vmem:[#allocation5 + $0x150] sm:$0xff]
    %v645 = vld [vmem:[#allocation5 + $0x158] sm:$0xff]
    %v646 = vld [vmem:[#allocation5 + $0x160] sm:$0xff]
    %v647 = vld [vmem:[#allocation5 + $0x168] sm:$0xff]
    %v648 = vld [vmem:[#allocation5 + $0x170] sm:$0xff]
    %v649 = vld [vmem:[#allocation5 + $0x178] sm:$0xff]
    %v650 = vld [vmem:[#allocation5 + $0x180] sm:$0xff]
    %v651 = vlaneseq
    %v652 = vshrl.u32 %v651, 7
    %v653 = vsub.s32 1, %v652
    %v654 = vrot.slane %v382, %v653
    %655 = vmatprep.subr.mxu0 0.0
    %656 = vmatpush1.msra.mxu0 %v650
    %657 = vmatprep.subr.mxu0 0.0
    %658 = vmatpush1.msra.mxu0 %v649
    %659 = vmatprep.subr.mxu0 0.0
    %660 = vmatpush1.msra.mxu0 %v648
    %661 = vmatprep.subr.mxu0 0.0
    %662 = vmatpush1.msra.mxu0 %v647
    %663 = vmatprep.subr.mxu0 0.0
    %664 = vmatpush1.msra.mxu0 %v646
    %665 = vmatprep.subr.mxu0 0.0
    %666 = vmatpush1.msra.mxu0 %v645
    %667 = vmatprep.subr.mxu0 0.0
    %668 = vmatpush1.msra.mxu0 %v644
    %669 = vmatprep.subr.mxu0 0.0
    %670 = vmatpush1.msra.mxu0 %v643
    %671 = vmatprep.subr.mxu0 0.0
    %672 = vmatpush1.msra.mxu0 %v642
    %673 = vmatprep.subr.mxu0 0.0
    %674 = vmatpush1.msra.mxu0 %v641
    %675 = vmatprep.subr.mxu0 0.0
    %676 = vmatpush1.msra.mxu0 %v640
    %677 = vmatprep.subr.mxu0 0.0
    %678 = vmatpush1.msra.mxu0 %v639
    %679 = vmatprep.subr.mxu0 0.0
    %680 = vmatpush1.msra.mxu0 %v638
    %681 = vmatprep.subr.mxu0 0.0
    %682 = vmatpush1.msra.mxu0 %v637
    %683 = vmatprep.subr.mxu0 0.0
    %684 = vmatpush1.msra.mxu0 %v636
    %685 = vmatprep.subr.mxu0 0.0
    %686 = vmatpush1.msra.mxu0 %v635
    %687 = vmatprep.subr.mxu0 0.0
    %688 = vmatpush2.msra.mxu0 0.0
    %689 = vmatprep.subr.mxu0 0.0
    %690 = vmatpush2.msra.mxu0 0.0
    %691 = vmatprep.subr.mxu0 0.0
    %692 = vmatpush2.msra.mxu0 0.0
    %693 = vmatprep.subr.mxu0 0.0
    %694 = vmatpush2.msra.mxu0 0.0
    %695 = vmatprep.subr.mxu0 0.0
    %696 = vmatpush2.msra.mxu0 0.0
    %697 = vmatprep.subr.mxu0 0.0
    %698 = vmatpush2.msra.mxu0 0.0
    %699 = vmatprep.subr.mxu0 0.0
    %700 = vmatpush2.msra.mxu0 0.0
    %701 = vmatprep.subr.mxu0 0.0
    %702 = vmatpush2.msra.mxu0 0.0
    %703 = vmatprep.subr.mxu0 0.0
    %704 = vmatpush2.msra.mxu0 0.0
    %705 = vmatprep.subr.mxu0 0.0
    %706 = vmatpush2.msra.mxu0 0.0
    %707 = vmatprep.subr.mxu0 0.0
    %708 = vmatpush2.msra.mxu0 0.0
    %709 = vmatprep.subr.mxu0 0.0
    %710 = vmatpush2.msra.mxu0 0.0
    %711 = vmatprep.subr.mxu0 0.0
    %712 = vmatpush2.msra.mxu0 0.0
    %713 = vmatprep.subr.mxu0 0.0
    %714 = vmatpush2.msra.mxu0 0.0
    %715 = vmatprep.subr.mxu0 0.0
    %716 = vmatpush2.msra.mxu0 0.0
    %717 = vmatprep.subr.mxu0 0.0
    %718 = vmatpush2.msra.mxu0 0.0
    %719 = vmatprep.mubr.f32.mxu0 0.0
    %720 = vmatmul.mubr.f32.gmra.mxu0 %v632
    %v721 = vpop.f32.mrf.mxu0
    %v722 = vadd.f32 %v654, %v721
    %v723 = vpop.f32.mrf.mxu0
    %724 = vdwg.mxu0
    %v725 = vmax.f32 %v722, 0.0
    %v726 = vld [vmem:[#allocation5 + $0x188] sm:$0xff]
    %v727 = vld [vmem:[#allocation5 + $0x190] sm:$0xff]
    %v728 = vld [vmem:[#allocation5 + $0x198] sm:$0xff]
    %v729 = vld [vmem:[#allocation5 + $0x1a0] sm:$0xff]
    %v730 = vld [vmem:[#allocation5 + $0x1a8] sm:$0xff]
    %v731 = vld [vmem:[#allocation5 + $0x1b0] sm:$0xff]
    %v732 = vld [vmem:[#allocation5 + $0x1b8] sm:$0xff]
    %v733 = vld [vmem:[#allocation5 + $0x1c0] sm:$0xff]
    %v734 = vld [vmem:[#allocation5 + $0x1c8] sm:$0xff]
    %v735 = vld [vmem:[#allocation5 + $0x1d0] sm:$0xff]
    %v736 = vld [vmem:[#allocation5 + $0x1d8] sm:$0xff]
    %v737 = vld [vmem:[#allocation5 + $0x1e0] sm:$0xff]
    %v738 = vld [vmem:[#allocation5 + $0x1e8] sm:$0xff]
    %v739 = vld [vmem:[#allocation5 + $0x1f0] sm:$0xff]
    %v740 = vld [vmem:[#allocation5 + $0x1f8] sm:$0xff]
    %v741 = vld [vmem:[#allocation5 + $0x200] sm:$0xff]
    %v742 = vlaneseq
    %v743 = vshrl.u32 %v742, 7
    %v744 = vsub.s32 2, %v743
    %v745 = vrot.slane %v382, %v744
    %746 = vmatprep.subr.mxu0 0.0
    %747 = vmatpush1.msra.mxu0 %v741
    %748 = vmatprep.subr.mxu0 0.0
    %749 = vmatpush1.msra.mxu0 %v740
    %750 = vmatprep.subr.mxu0 0.0
    %751 = vmatpush1.msra.mxu0 %v739
    %752 = vmatprep.subr.mxu0 0.0
    %753 = vmatpush1.msra.mxu0 %v738
    %754 = vmatprep.subr.mxu0 0.0
    %755 = vmatpush1.msra.mxu0 %v737
    %756 = vmatprep.subr.mxu0 0.0
    %757 = vmatpush1.msra.mxu0 %v736
    %758 = vmatprep.subr.mxu0 0.0
    %759 = vmatpush1.msra.mxu0 %v735
    %760 = vmatprep.subr.mxu0 0.0
    %761 = vmatpush1.msra.mxu0 %v734
    %762 = vmatprep.subr.mxu0 0.0
    %763 = vmatpush1.msra.mxu0 %v733
    %764 = vmatprep.subr.mxu0 0.0
    %765 = vmatpush1.msra.mxu0 %v732
    %766 = vmatprep.subr.mxu0 0.0
    %767 = vmatpush1.msra.mxu0 %v731
    %768 = vmatprep.subr.mxu0 0.0
    %769 = vmatpush1.msra.mxu0 %v730
    %770 = vmatprep.subr.mxu0 0.0
    %771 = vmatpush1.msra.mxu0 %v729
    %772 = vmatprep.subr.mxu0 0.0
    %773 = vmatpush1.msra.mxu0 %v728
    %774 = vmatprep.subr.mxu0 0.0
    %775 = vmatpush1.msra.mxu0 %v727
    %776 = vmatprep.subr.mxu0 0.0
    %777 = vmatpush1.msra.mxu0 %v726
    %778 = vmatprep.subr.mxu0 0.0
    %779 = vmatpush2.msra.mxu0 0.0
    %780 = vmatprep.subr.mxu0 0.0
    %781 = vmatpush2.msra.mxu0 0.0
    %782 = vmatprep.subr.mxu0 0.0
    %783 = vmatpush2.msra.mxu0 0.0
    %784 = vmatprep.subr.mxu0 0.0
    %785 = vmatpush2.msra.mxu0 0.0
    %786 = vmatprep.subr.mxu0 0.0
    %787 = vmatpush2.msra.mxu0 0.0
    %788 = vmatprep.subr.mxu0 0.0
    %789 = vmatpush2.msra.mxu0 0.0
    %790 = vmatprep.subr.mxu0 0.0
    %791 = vmatpush2.msra.mxu0 0.0
    %792 = vmatprep.subr.mxu0 0.0
    %793 = vmatpush2.msra.mxu0 0.0
    %794 = vmatprep.subr.mxu0 0.0
    %795 = vmatpush2.msra.mxu0 0.0
    %796 = vmatprep.subr.mxu0 0.0
    %797 = vmatpush2.msra.mxu0 0.0
    %798 = vmatprep.subr.mxu0 0.0
    %799 = vmatpush2.msra.mxu0 0.0
    %800 = vmatprep.subr.mxu0 0.0
    %801 = vmatpush2.msra.mxu0 0.0
    %802 = vmatprep.subr.mxu0 0.0
    %803 = vmatpush2.msra.mxu0 0.0
    %804 = vmatprep.subr.mxu0 0.0
    %805 = vmatpush2.msra.mxu0 0.0
    %806 = vmatprep.subr.mxu0 0.0
    %807 = vmatpush2.msra.mxu0 0.0
    %808 = vmatprep.subr.mxu0 0.0
    %809 = vmatpush2.msra.mxu0 0.0
    %810 = vmatprep.mubr.f32.mxu0 0.0
    %811 = vmatmul.mubr.f32.gmra.mxu0 %v725
    %v812 = vpop.f32.mrf.mxu0
    %v813 = vadd.f32 %v745, %v812
    %v814 = vpop.f32.mrf.mxu0
    %815 = vdwg.mxu0
    %816 = vst [vmem:[#allocation7] sm:$0xff] %v813
    // Predicated region
    $region18: #{tpu_custom_call.1} parent=1 // pred_check
      _
    $region19: #{tpu_custom_call.1} parent=1 // pred_check_branch
      %818 = sbr.rel (0) target = $region21
    $region20: #{tpu_custom_call.1} parent=1 // pred_region
      %s820 = ssub.s32 128, 128
      %821 = vsyncadd [#allocation4], %s820
      %s823 = sshll.u32 [#allocation7], 4
      %s824 = int_to_ptr.vmem [resolvable:$true] %s823
      %826 = dma.vmem_to_hbm [thread:$0]  %s824, 128, %s2, [#allocation4]
    $region21: #{tpu_custom_call.1} parent=1 // pred_fallthru
      _
    // Predicated region
    $region22: #{tpu_custom_call.1} parent=1 // pred_check
      _
    $region23: #{tpu_custom_call.1} parent=1 // pred_check_branch
      %828 = sbr.rel (0) target = $region25
    $region24: #{tpu_custom_call.1} parent=1 // pred_region
      %829 = dma.done [#allocation4], 128
    $region25: #{tpu_custom_call.1} parent=1 // pred_fallthru
      _
    %830 = vsyncpa [#allocation3], 1
    %831 = vsyncpa [#allocation6], 1
    %832 = vsyncpa [#allocation4], 1

</llo_original>
